<compile_context>
chip_gen: v7x
topology: tpu7x:2x2x1
jax: 0.10.0
libtpu: 0.0.40
codegen_flags: <defaults>
</compile_context>

<pallas_src>
import jax
import jax.numpy as jnp
from jax.experimental import pallas as pl
from jax.experimental.pallas import tpu as pltpu


def _mbconv_residual_kernel(x_ref, w_ref, b_ref, o_ref):
    # x_ref / o_ref: (n_blk, C, t_hw)   w_ref: (C, C) residual-folded   b_ref: (C, 1) f32
    w = w_ref[...]
    bias = b_ref[...]
    # TODO(synk): training-mode Dropsample (prob > 0, stochastic per-sample keep mask)
    # is not implemented; prob == 0 / eval mode is the identity path used here.
    for i in range(x_ref.shape[0]):  # n_blk is a small static constant -> unrolled
        acc = jnp.dot(
            w,
            x_ref[i],
            preferred_element_type=jnp.float32,
            precision=jax.lax.Precision.HIGHEST,
        )
        o_ref[i] = (acc + bias).astype(o_ref.dtype)


def _vmem_capacity_bytes():
    """Physical VMEM per TensorCore; conservative (v7x-sized) fallback."""
    try:
        cap = getattr(pltpu.get_tpu_info(), "vmem_capacity_bytes", None)
        if cap:
            return int(cap)
    except Exception:
        pass
    return 64 * 1024 * 1024


def _pick_tiling(N, C, HW, itemsize, vmem_limit_bytes):
    """Pick (n_blk, t_hw, grid) for the memory-bound streaming kernel."""
    LANE = 128
    SUB = 8 * max(1, 4 // itemsize)                 # sublanes per vreg row group
    c_pad = ((C + SUB - 1) // SUB) * SUB            # VMEM sublane-padded channel rows

    # Pack batch images per block while C is small (cuts grid steps, bigger DMAs).
    n_blk_cap = max(1, (16 * SUB) // c_pad)
    n_blk = 1
    for d in range(min(N, n_blk_cap), 0, -1):
        if N % d == 0:
            n_blk = d
            break

    # HW tile: aim for ~4 MiB of DMA per block; keep double-buffered in+out blocks
    # (plus the resident weight) under ~80% of the scoped VMEM limit.
    target_block_bytes = 4 * 1024 * 1024
    weight_cols = max(LANE, ((C + LANE - 1) // LANE) * LANE)
    weight_bytes = 2 * c_pad * weight_cols * itemsize
    budget = int(vmem_limit_bytes * 0.8) - weight_bytes
    per_lane_bytes = n_blk * c_pad * itemsize
    t_hw = min(
        target_block_bytes // per_lane_bytes,
        max(LANE, budget // (4 * per_lane_bytes)),
        16384,
    )
    t_hw = max((t_hw // LANE) * LANE, LANE)
    if t_hw >= HW:
        t_hw = HW                                    # full extent: always a legal block
    grid = (N // n_blk, pl.cdiv(HW, t_hw))           # masked tail block if HW % t_hw != 0
    return n_blk, t_hw, grid


def mbconv_residual(x_nchw, w, b):
    """x_nchw: (N, C, H, W); w: (C, C); b: (C,).

    Returns (N, C, H, W) = (w @ x + b) + x per pixel (1x1-conv fn + residual add;
    Dropsample(prob=0) is the identity).
    """
    N, C, H, W = x_nchw.shape
    HW = H * W
    dtype = x_nchw.dtype
    itemsize = jnp.dtype(dtype).itemsize

    vmem_cap = _vmem_capacity_bytes()
    # ~48 MiB scoped budget on v7x (64 MiB/TC), ~96 MiB on v5e/v6e (128 MiB/TC).
    vmem_limit = min(vmem_cap * 3 // 4, 96 * 1024 * 1024)

    n_blk, t_hw, grid = _pick_tiling(N, C, HW, itemsize, vmem_limit)

    # NCHW -> (N, C, HW): pure reshape, no data movement.
    x_seq = x_nchw.reshape(N, C, HW)
    # Fold the residual into the weight: (w + I) @ x + b == (w @ x + b) + x.
    w_eff = (w.astype(jnp.float32) + jnp.eye(C, dtype=jnp.float32)).astype(dtype)
    b2 = b.astype(jnp.float32).reshape(C, 1)

    out_seq = pl.pallas_call(
        _mbconv_residual_kernel,
        out_shape=jax.ShapeDtypeStruct((N, C, HW), dtype),
        grid_spec=pltpu.PrefetchScalarGridSpec(
            num_scalar_prefetch=0,
            grid=grid,
            in_specs=[
                # (n_blk, C, t_hw) activation block: batch-packed, lane-dense on HW.
                pl.BlockSpec((n_blk, C, t_hw), lambda nb, t: (nb, 0, t)),
                # Weight / bias: constant block index -> resident, fetched once.
                pl.BlockSpec((C, C), lambda nb, t: (0, 0)),
                pl.BlockSpec((C, 1), lambda nb, t: (0, 0)),
            ],
            out_specs=pl.BlockSpec((n_blk, C, t_hw), lambda nb, t: (nb, 0, t)),
        ),
        compiler_params=pltpu.CompilerParams(
            dimension_semantics=("parallel", "parallel"),
            vmem_limit_bytes=vmem_limit,
        ),
    )(x_seq, w_eff, b2)

    return out_seq.reshape(N, C, H, W)


if __name__ == "__main__":
    key = jax.random.PRNGKey(0)
    kx, kw, kb = jax.random.split(key, 3)

    N, C, H, W = 2, 4, 16, 16
    x = jax.random.normal(kx, (N, C, H, W), dtype=jnp.float32)
    # Deterministic parameters for the instantiated fn (1x1 conv): weight (C_out, C_in), bias (C_out,)
    w = jax.random.normal(kw, (C, C), dtype=jnp.float32) * 0.1
    b = jax.random.normal(kb, (C,), dtype=jnp.float32) * 0.1

    out = jax.block_until_ready(mbconv_residual(x, w, b))

    # Plain-JAX reference of the module: fn(x) + x  (Dropsample(prob=0) is identity).
    fn_ref = jnp.einsum(
        "nchw,oc->nohw", x, w, precision=jax.lax.Precision.HIGHEST
    ) + b[None, :, None, None]
    ref = fn_ref + x
    assert out.shape == (N, C, H, W)
    # Tolerance accommodates MXU multiply-pass rounding / accumulation-order change
    # from folding the residual into the weight.
    assert jnp.allclose(out, ref, atol=1e-3, rtol=1e-3), "mismatch vs reference"

    print("KERNEL_OK")
</pallas_src>

<mosaic_0001>
module attributes {stable_mosaic.version = 11 : i64} {
  func.func @_mbconv_residual_kernel(%arg0: i32, %arg1: i32, %arg2: memref<2x4x256xf32, #tpu.memory_space<vmem>>, %arg3: memref<4x4xf32, #tpu.memory_space<vmem>>, %arg4: memref<4x1xf32, #tpu.memory_space<vmem>>, %arg5: memref<2x4x256xf32, #tpu.memory_space<vmem>>) attributes {dimension_semantics = [#tpu.dimension_semantics<parallel>, #tpu.dimension_semantics<parallel>], iteration_bounds = array<i64: 1, 1>, scalar_prefetch = 0 : i64, scratch_operands = 0 : i64, tpu.core_type = #tpu.core_type<tc>, window_params = [{transform_indices = @transform_0, window_bounds = array<i64: 2, 4, 256>}, {pipeline_mode = #tpu.pipeline_mode<synchronous>, transform_indices = @transform_1, window_bounds = array<i64: 4, 4>}, {pipeline_mode = #tpu.pipeline_mode<synchronous>, transform_indices = @transform_2, window_bounds = array<i64: 4, 1>}, {transform_indices = @transform_3, window_bounds = array<i64: 2, 4, 256>}]} {
    %c0 = arith.constant 0 : index
    %c0_0 = arith.constant 0 : index
    %0 = vector.load %arg3[%c0, %c0_0] : memref<4x4xf32, #tpu.memory_space<vmem>>, vector<4x4xf32>
    %c0_1 = arith.constant 0 : index
    %c0_2 = arith.constant 0 : index
    %1 = vector.load %arg4[%c0_1, %c0_2] : memref<4x1xf32, #tpu.memory_space<vmem>>, vector<4x1xf32>
    %c0_3 = arith.constant 0 : index
    %c0_4 = arith.constant 0 : index
    %c0_5 = arith.constant 0 : index
    %2 = vector.load %arg2[%c0_3, %c0_4, %c0_5] : memref<2x4x256xf32, #tpu.memory_space<vmem>>, vector<1x4x256xf32>
    %3 = vector.shape_cast %2 : vector<1x4x256xf32> to vector<4x256xf32>
    %cst = arith.constant dense<0.000000e+00> : vector<4x256xf32>
    %4 = tpu.matmul %0, %3, %cst {dimension_numbers = #tpu.dot_dimension_numbers<[1], [0], [0], [1], [0, 0, 1, 1], [], []>, precision = #tpu.contract_precision<fp32>} : vector<4x4xf32>, vector<4x256xf32>, vector<4x256xf32> -> vector<4x256xf32>
    %5 = vector.broadcast %1 : vector<4x1xf32> to vector<4x256xf32>
    %6 = arith.addf %4, %5 : vector<4x256xf32>
    %c0_6 = arith.constant 0 : index
    %c0_7 = arith.constant 0 : index
    %c0_8 = arith.constant 0 : index
    %7 = vector.load %arg5[%c0_6, %c0_7, %c0_8] : memref<2x4x256xf32, #tpu.memory_space<vmem>>, vector<1x4x256xf32>
    %8 = vector.shape_cast %7 : vector<1x4x256xf32> to vector<4x256xf32>
    %9 = vector.shape_cast %6 : vector<4x256xf32> to vector<1x4x256xf32>
    tpu.vector_store %arg5[%c0_6, %c0_7, %c0_8], %9 {strides = array<i32>} : memref<2x4x256xf32, #tpu.memory_space<vmem>>, vector<1x4x256xf32>,
    %c1 = arith.constant 1 : index
    %c0_9 = arith.constant 0 : index
    %c0_10 = arith.constant 0 : index
    %10 = vector.load %arg2[%c1, %c0_9, %c0_10] : memref<2x4x256xf32, #tpu.memory_space<vmem>>, vector<1x4x256xf32>
    %11 = vector.shape_cast %10 : vector<1x4x256xf32> to vector<4x256xf32>
    %cst_11 = arith.constant dense<0.000000e+00> : vector<4x256xf32>
    %12 = tpu.matmul %0, %11, %cst_11 {dimension_numbers = #tpu.dot_dimension_numbers<[1], [0], [0], [1], [0, 0, 1, 1], [], []>, precision = #tpu.contract_precision<fp32>} : vector<4x4xf32>, vector<4x256xf32>, vector<4x256xf32> -> vector<4x256xf32>
    %13 = vector.broadcast %1 : vector<4x1xf32> to vector<4x256xf32>
    %14 = arith.addf %12, %13 : vector<4x256xf32>
    %c1_12 = arith.constant 1 : index
    %c0_13 = arith.constant 0 : index
    %c0_14 = arith.constant 0 : index
    %15 = vector.load %arg5[%c1_12, %c0_13, %c0_14] : memref<2x4x256xf32, #tpu.memory_space<vmem>>, vector<1x4x256xf32>
    %16 = vector.shape_cast %15 : vector<1x4x256xf32> to vector<4x256xf32>
    %17 = vector.shape_cast %14 : vector<4x256xf32> to vector<1x4x256xf32>
    tpu.vector_store %arg5[%c1_12, %c0_13, %c0_14], %17 {strides = array<i32>} : memref<2x4x256xf32, #tpu.memory_space<vmem>>, vector<1x4x256xf32>,
    return
  }
  func.func @transform_0(%arg0: i32, %arg1: i32) -> (i32, i32, i32) {
    %c0_i32 = arith.constant 0 : i32
    %c0_i32_0 = arith.constant 0 : i32
    return %arg0, %c0_i32, %arg1 : i32, i32, i32
  }
  func.func @transform_1(%arg0: i32, %arg1: i32) -> (i32, i32) {
    %c0_i32 = arith.constant 0 : i32
    %c0_i32_0 = arith.constant 0 : i32
    %c0_i32_1 = arith.constant 0 : i32
    return %c0_i32, %c0_i32_0 : i32, i32
  }
  func.func @transform_2(%arg0: i32, %arg1: i32) -> (i32, i32) {
    %c0_i32 = arith.constant 0 : i32
    %c0_i32_0 = arith.constant 0 : i32
    %c0_i32_1 = arith.constant 0 : i32
    return %c0_i32, %c0_i32_0 : i32, i32
  }
  func.func @transform_3(%arg0: i32, %arg1: i32) -> (i32, i32, i32) {
    %c0_i32 = arith.constant 0 : i32
    %c0_i32_0 = arith.constant 0 : i32
    return %arg0, %c0_i32, %arg1 : i32, i32, i32
  }
}

</mosaic_0001>

<llo_original>
// kernel: tpu_custom_call.1
$region0: #{tpu_custom_call.1}
  #allocation0 [shape = 'u32[]', space=smem, size = 0x4, offset = 0x4, fixed_abs, tag = 'smem constant byte address 0x4 - core index']
  #allocation1 [shape = 'u32[144,128]{1,0:T(1,128)}', space=vmem, size = 0x12000, scoped, tag = 'internal scratch']
  %s0 = inlined_call_operand.hbm [shape: f32[2,4,256], index: 0, kind: input, shape index: {}]
  %s1 = inlined_call_operand.vmem [shape: f32[4,4], index: 1, kind: input, shape index: {}]
  %s2 = inlined_call_operand.vmem [shape: f32[4,1], index: 2, kind: input, shape index: {}]
  %s3 = inlined_call_operand.hbm [shape: f32[2,4,256], index: 3, kind: output, shape index: {}]
  %s4 = sld [smem:[#allocation0]]
  $region26: #{tpu_custom_call.1} parent=0
    _
  %s6 = ssub.s32 1, %s4
  %s7 = scalar_select 0, %s6, %s4
  $region1: #{tpu_custom_call.1} parent=0
    #allocation2 [shape = 'u8[8192]{0}', space=vmem, size = 0x2000, scoped, tag = 'input window, operand 0, single buffered']
    #allocation3 [shape = 's32[1]{0}', space=sflag, size = 0x4, scoped, tag = 'scoped memory for tpu_custom_call.1']
    #allocation4 [shape = 's32[1]{0}', space=sflag, size = 0x4, scoped, tag = 'scoped memory for tpu_custom_call.1']
    #allocation5 [shape = 'u8[8192]{0}', space=vmem, size = 0x2000, scoped, tag = 'output window, operand 0, single buffered']
    %8 = vsyncpa [#allocation3], 0
    %9 = vsyncpa [#allocation4], 0
    // Predicated region
    $region2: #{tpu_custom_call.1} parent=1 // pred_check
      _
    $region3: #{tpu_custom_call.1} parent=1 // pred_check_branch
      %11 = sbr.rel (0) target = $region5
    $region4: #{tpu_custom_call.1} parent=1 // pred_region
      %s13 = ssub.s32 256, 256
      %14 = vsyncadd [#allocation3], %s13
      %s15 = sshll.u32 [#allocation2], 4
      %s16 = int_to_ptr.vmem [resolvable:$true] %s15
      %21 = dma.hbm_to_vmem [thread:$0]  %s0, 256, %s16, [#allocation3], 128, 128, 8
    $region5: #{tpu_custom_call.1} parent=1 // pred_fallthru
      _
    // Predicated region
    $region6: #{tpu_custom_call.1} parent=1 // pred_check
      _
    $region7: #{tpu_custom_call.1} parent=1 // pred_check_branch
      %23 = sbr.rel (0) target = $region9
    $region8: #{tpu_custom_call.1} parent=1 // pred_region
      _
    $region9: #{tpu_custom_call.1} parent=1 // pred_fallthru
      _
    // Predicated region
    $region10: #{tpu_custom_call.1} parent=1 // pred_check
      _
    $region11: #{tpu_custom_call.1} parent=1 // pred_check_branch
      %25 = sbr.rel (0) target = $region13
    $region12: #{tpu_custom_call.1} parent=1 // pred_region
      _
    $region13: #{tpu_custom_call.1} parent=1 // pred_fallthru
      _
    // Predicated region
    $region14: #{tpu_custom_call.1} parent=1 // pred_check
      _
    $region15: #{tpu_custom_call.1} parent=1 // pred_check_branch
      %27 = sbr.rel (0) target = $region17
    $region16: #{tpu_custom_call.1} parent=1 // pred_region
      %28 = dma.done [#allocation3], 256
    $region17: #{tpu_custom_call.1} parent=1 // pred_fallthru
      _
    %v29 = vld [vmem:[%s1] sm:$0xf]
    %v30 = vld [vmem:[%s2] sm:$0xf]
    %v31 = vld [vmem:[#allocation2] sm:$0xff]
    %33 = vset.pattern.permute.xlu0 0
    %34 = vperm.xlu0 %33, %v30
    %v35 = vpop.permute.xlu0 %34
    %v38 = vcombine.high %v31, %v31
    %vm39 = vcmask 31744
    %v41 = vsel %vm39, %v29, 0
    %vm43 = vcmask 1043456
    %v44 = vsel %vm43, %v31, 0
    %v46 = vsel %vm43, %v38, 0
    %v48 = vand.u32 %v46, 4294901760
    %49 = vmatprep.subr.mxu0 %v48
    %v50 = vand.u32 %v44, 4294901760
    %51 = vmatpush1.msra.mxu0 %v50
    %52 = vmatprep.subr.mxu0 0.0
    %53 = vmatpush1.msra.mxu0 0.0
    %54 = vmatprep.subr.mxu0 0.0
    %55 = vmatpush1.msra.mxu0 0.0
    %56 = vmatprep.subr.mxu0 0.0
    %57 = vmatpush1.msra.mxu0 0.0
    %58 = vmatprep.subr.mxu0 0.0
    %59 = vmatpush1.msra.mxu0 0.0
    %60 = vmatprep.subr.mxu0 0.0
    %61 = vmatpush1.msra.mxu0 0.0
    %62 = vmatprep.subr.mxu0 0.0
    %63 = vmatpush1.msra.mxu0 0.0
    %64 = vmatprep.subr.mxu0 0.0
    %65 = vmatpush1.msra.mxu0 0.0
    %66 = vmatprep.subr.mxu0 0.0
    %67 = vmatpush1.msra.mxu0 0.0
    %68 = vmatprep.subr.mxu0 0.0
    %69 = vmatpush1.msra.mxu0 0.0
    %70 = vmatprep.subr.mxu0 0.0
    %71 = vmatpush1.msra.mxu0 0.0
    %72 = vmatprep.subr.mxu0 0.0
    %73 = vmatpush1.msra.mxu0 0.0
    %74 = vmatprep.subr.mxu0 0.0
    %75 = vmatpush1.msra.mxu0 0.0
    %76 = vmatprep.subr.mxu0 0.0
    %77 = vmatpush1.msra.mxu0 0.0
    %78 = vmatprep.subr.mxu0 0.0
    %79 = vmatpush1.msra.mxu0 0.0
    %80 = vmatprep.subr.mxu0 0.0
    %81 = vmatpush1.msra.mxu0 0.0
    %82 = vmatprep.subr.mxu0 0.0
    %83 = vmatpush1.msra.mxu0 0.0
    %84 = vmatprep.subr.mxu0 0.0
    %85 = vmatpush1.msra.mxu0 0.0
    %86 = vmatprep.subr.mxu0 0.0
    %87 = vmatpush1.msra.mxu0 0.0
    %88 = vmatprep.subr.mxu0 0.0
    %89 = vmatpush1.msra.mxu0 0.0
    %90 = vmatprep.subr.mxu0 0.0
    %91 = vmatpush1.msra.mxu0 0.0
    %92 = vmatprep.subr.mxu0 0.0
    %93 = vmatpush1.msra.mxu0 0.0
    %94 = vmatprep.subr.mxu0 0.0
    %95 = vmatpush1.msra.mxu0 0.0
    %96 = vmatprep.subr.mxu0 0.0
    %97 = vmatpush1.msra.mxu0 0.0
    %98 = vmatprep.subr.mxu0 0.0
    %99 = vmatpush1.msra.mxu0 0.0
    %100 = vmatprep.subr.mxu0 0.0
    %101 = vmatpush1.msra.mxu0 0.0
    %102 = vmatprep.subr.mxu0 0.0
    %103 = vmatpush1.msra.mxu0 0.0
    %104 = vmatprep.subr.mxu0 0.0
    %105 = vmatpush1.msra.mxu0 0.0
    %106 = vmatprep.subr.mxu0 0.0
    %107 = vmatpush1.msra.mxu0 0.0
    %108 = vmatprep.subr.mxu0 0.0
    %109 = vmatpush1.msra.mxu0 0.0
    %110 = vmatprep.subr.mxu0 0.0
    %111 = vmatpush1.msra.mxu0 0.0
    %112 = vmatprep.subr.mxu0 0.0
    %113 = vmatpush1.msra.mxu0 0.0
    %114 = vmatprep.mubr.f32.mxu0 0.0
    %v115 = vand.u32 %v41, 4294901760
    %v116 = vsub.f32 %v41, %v115
    %v117 = vand.u32 %v116, 4294901760
    %v118 = vsub.f32 %v116, %v117
    %v119 = vand.u32 %v118, 4294901760
    %120 = vmatmul.mubr.f32.gmra.mrb[0].mxu0 %v119
    %v121 = vpop.f32.mrb[0].mxu0
    %v122 = vadd.f32 %v35, %v121
    %v123 = vpop.f32.mrb[0].mxu0
    %v124 = vadd.f32 %v35, %v123
    %125 = vdwg.mxu0
    %v126 = vand.u32 %v46, 4294901760
    %v127 = vsub.f32 %v46, %v126
    %v128 = vand.u32 %v127, 4294901760
    %v129 = vsub.f32 %v127, %v128
    %v130 = vand.u32 %v129, 4294901760
    %131 = vmatprep.subr.mxu0 %v130
    %v132 = vand.u32 %v44, 4294901760
    %v133 = vsub.f32 %v44, %v132
    %v134 = vand.u32 %v133, 4294901760
    %v135 = vsub.f32 %v133, %v134
    %v136 = vand.u32 %v135, 4294901760
    %137 = vmatpush1.msra.mxu0 %v136
    %138 = vmatprep.subr.mxu0 0.0
    %139 = vmatpush1.msra.mxu0 0.0
    %140 = vmatprep.subr.mxu0 0.0
    %141 = vmatpush1.msra.mxu0 0.0
    %142 = vmatprep.subr.mxu0 0.0
    %143 = vmatpush1.msra.mxu0 0.0
    %144 = vmatprep.subr.mxu0 0.0
    %145 = vmatpush1.msra.mxu0 0.0
    %146 = vmatprep.subr.mxu0 0.0
    %147 = vmatpush1.msra.mxu0 0.0
    %148 = vmatprep.subr.mxu0 0.0
    %149 = vmatpush1.msra.mxu0 0.0
    %150 = vmatprep.subr.mxu0 0.0
    %151 = vmatpush1.msra.mxu0 0.0
    %152 = vmatprep.subr.mxu0 0.0
    %153 = vmatpush1.msra.mxu0 0.0
    %154 = vmatprep.subr.mxu0 0.0
    %155 = vmatpush1.msra.mxu0 0.0
    %156 = vmatprep.subr.mxu0 0.0
    %157 = vmatpush1.msra.mxu0 0.0
    %158 = vmatprep.subr.mxu0 0.0
    %159 = vmatpush1.msra.mxu0 0.0
    %160 = vmatprep.subr.mxu0 0.0
    %161 = vmatpush1.msra.mxu0 0.0
    %162 = vmatprep.subr.mxu0 0.0
    %163 = vmatpush1.msra.mxu0 0.0
    %164 = vmatprep.subr.mxu0 0.0
    %165 = vmatpush1.msra.mxu0 0.0
    %166 = vmatprep.subr.mxu0 0.0
    %167 = vmatpush1.msra.mxu0 0.0
    %168 = vmatprep.subr.mxu0 0.0
    %169 = vmatpush1.msra.mxu0 0.0
    %170 = vmatprep.subr.mxu0 0.0
    %171 = vmatpush1.msra.mxu0 0.0
    %172 = vmatprep.subr.mxu0 0.0
    %173 = vmatpush1.msra.mxu0 0.0
    %174 = vmatprep.subr.mxu0 0.0
    %175 = vmatpush1.msra.mxu0 0.0
    %176 = vmatprep.subr.mxu0 0.0
    %177 = vmatpush1.msra.mxu0 0.0
    %178 = vmatprep.subr.mxu0 0.0
    %179 = vmatpush1.msra.mxu0 0.0
    %180 = vmatprep.subr.mxu0 0.0
    %181 = vmatpush1.msra.mxu0 0.0
    %182 = vmatprep.subr.mxu0 0.0
    %183 = vmatpush1.msra.mxu0 0.0
    %184 = vmatprep.subr.mxu0 0.0
    %185 = vmatpush1.msra.mxu0 0.0
    %186 = vmatprep.subr.mxu0 0.0
    %187 = vmatpush1.msra.mxu0 0.0
    %188 = vmatprep.subr.mxu0 0.0
    %189 = vmatpush1.msra.mxu0 0.0
    %190 = vmatprep.subr.mxu0 0.0
    %191 = vmatpush1.msra.mxu0 0.0
    %192 = vmatprep.subr.mxu0 0.0
    %193 = vmatpush1.msra.mxu0 0.0
    %194 = vmatprep.subr.mxu0 0.0
    %195 = vmatpush1.msra.mxu0 0.0
    %196 = vmatprep.subr.mxu0 0.0
    %197 = vmatpush1.msra.mxu0 0.0
    %198 = vmatprep.subr.mxu0 0.0
    %199 = vmatpush1.msra.mxu0 0.0
    %200 = vmatprep.mubr.f32.mxu0 0.0
    %v201 = vand.u32 %v41, 4294901760
    %202 = vmatmul.mubr.f32.gmra.mrb[0].mxu0 %v201
    %v203 = vpop.f32.mrb[0].mxu0
    %v204 = vadd.f32 %v122, %v203
    %v205 = vpop.f32.mrb[0].mxu0
    %v206 = vadd.f32 %v124, %v205
    %207 = vdwg.mxu0
    %v208 = vand.u32 %v46, 4294901760
    %v209 = vsub.f32 %v46, %v208
    %210 = vmatprep.subr.mxu0 %v209
    %v211 = vand.u32 %v44, 4294901760
    %v212 = vsub.f32 %v44, %v211
    %213 = vmatpush1.msra.mxu0 %v212
    %214 = vmatprep.subr.mxu0 0.0
    %215 = vmatpush1.msra.mxu0 0.0
    %216 = vmatprep.subr.mxu0 0.0
    %217 = vmatpush1.msra.mxu0 0.0
    %218 = vmatprep.subr.mxu0 0.0
    %219 = vmatpush1.msra.mxu0 0.0
    %220 = vmatprep.subr.mxu0 0.0
    %221 = vmatpush1.msra.mxu0 0.0
    %222 = vmatprep.subr.mxu0 0.0
    %223 = vmatpush1.msra.mxu0 0.0
    %224 = vmatprep.subr.mxu0 0.0
    %225 = vmatpush1.msra.mxu0 0.0
    %226 = vmatprep.subr.mxu0 0.0
    %227 = vmatpush1.msra.mxu0 0.0
    %228 = vmatprep.subr.mxu0 0.0
    %229 = vmatpush1.msra.mxu0 0.0
    %230 = vmatprep.subr.mxu0 0.0
    %231 = vmatpush1.msra.mxu0 0.0
    %232 = vmatprep.subr.mxu0 0.0
    %233 = vmatpush1.msra.mxu0 0.0
    %234 = vmatprep.subr.mxu0 0.0
    %235 = vmatpush1.msra.mxu0 0.0
    %236 = vmatprep.subr.mxu0 0.0
    %237 = vmatpush1.msra.mxu0 0.0
    %238 = vmatprep.subr.mxu0 0.0
    %239 = vmatpush1.msra.mxu0 0.0
    %240 = vmatprep.subr.mxu0 0.0
    %241 = vmatpush1.msra.mxu0 0.0
    %242 = vmatprep.subr.mxu0 0.0
    %243 = vmatpush1.msra.mxu0 0.0
    %244 = vmatprep.subr.mxu0 0.0
    %245 = vmatpush1.msra.mxu0 0.0
    %246 = vmatprep.subr.mxu0 0.0
    %247 = vmatpush1.msra.mxu0 0.0
    %248 = vmatprep.subr.mxu0 0.0
    %249 = vmatpush1.msra.mxu0 0.0
    %250 = vmatprep.subr.mxu0 0.0
    %251 = vmatpush1.msra.mxu0 0.0
    %252 = vmatprep.subr.mxu0 0.0
    %253 = vmatpush1.msra.mxu0 0.0
    %254 = vmatprep.subr.mxu0 0.0
    %255 = vmatpush1.msra.mxu0 0.0
    %256 = vmatprep.subr.mxu0 0.0
    %257 = vmatpush1.msra.mxu0 0.0
    %258 = vmatprep.subr.mxu0 0.0
    %259 = vmatpush1.msra.mxu0 0.0
    %260 = vmatprep.subr.mxu0 0.0
    %261 = vmatpush1.msra.mxu0 0.0
    %262 = vmatprep.subr.mxu0 0.0
    %263 = vmatpush1.msra.mxu0 0.0
    %264 = vmatprep.subr.mxu0 0.0
    %265 = vmatpush1.msra.mxu0 0.0
    %266 = vmatprep.subr.mxu0 0.0
    %267 = vmatpush1.msra.mxu0 0.0
    %268 = vmatprep.subr.mxu0 0.0
    %269 = vmatpush1.msra.mxu0 0.0
    %270 = vmatprep.subr.mxu0 0.0
    %271 = vmatpush1.msra.mxu0 0.0
    %272 = vmatprep.subr.mxu0 0.0
    %273 = vmatpush1.msra.mxu0 0.0
    %274 = vmatprep.subr.mxu0 0.0
    %275 = vmatpush1.msra.mxu0 0.0
    %276 = vmatprep.mubr.f32.mxu0 0.0
    %v277 = vand.u32 %v41, 4294901760
    %v278 = vsub.f32 %v41, %v277
    %279 = vmatmul.mubr.f32.gmra.mrb[0].mxu0 %v278
    %v280 = vpop.f32.mrb[0].mxu0
    %v281 = vadd.f32 %v204, %v280
    %v282 = vpop.f32.mrb[0].mxu0
    %v283 = vadd.f32 %v206, %v282
    %284 = vdwg.mxu0
    %v285 = vand.u32 %v46, 4294901760
    %286 = vmatprep.subr.mxu0 %v285
    %v287 = vand.u32 %v44, 4294901760
    %288 = vmatpush1.msra.mxu0 %v287
    %289 = vmatprep.subr.mxu0 0.0
    %290 = vmatpush1.msra.mxu0 0.0
    %291 = vmatprep.subr.mxu0 0.0
    %292 = vmatpush1.msra.mxu0 0.0
    %293 = vmatprep.subr.mxu0 0.0
    %294 = vmatpush1.msra.mxu0 0.0
    %295 = vmatprep.subr.mxu0 0.0
    %296 = vmatpush1.msra.mxu0 0.0
    %297 = vmatprep.subr.mxu0 0.0
    %298 = vmatpush1.msra.mxu0 0.0
    %299 = vmatprep.subr.mxu0 0.0
    %300 = vmatpush1.msra.mxu0 0.0
    %301 = vmatprep.subr.mxu0 0.0
    %302 = vmatpush1.msra.mxu0 0.0
    %303 = vmatprep.subr.mxu0 0.0
    %304 = vmatpush1.msra.mxu0 0.0
    %305 = vmatprep.subr.mxu0 0.0
    %306 = vmatpush1.msra.mxu0 0.0
    %307 = vmatprep.subr.mxu0 0.0
    %308 = vmatpush1.msra.mxu0 0.0
    %309 = vmatprep.subr.mxu0 0.0
    %310 = vmatpush1.msra.mxu0 0.0
    %311 = vmatprep.subr.mxu0 0.0
    %312 = vmatpush1.msra.mxu0 0.0
    %313 = vmatprep.subr.mxu0 0.0
    %314 = vmatpush1.msra.mxu0 0.0
    %315 = vmatprep.subr.mxu0 0.0
    %316 = vmatpush1.msra.mxu0 0.0
    %317 = vmatprep.subr.mxu0 0.0
    %318 = vmatpush1.msra.mxu0 0.0
    %319 = vmatprep.subr.mxu0 0.0
    %320 = vmatpush1.msra.mxu0 0.0
    %321 = vmatprep.subr.mxu0 0.0
    %322 = vmatpush1.msra.mxu0 0.0
    %323 = vmatprep.subr.mxu0 0.0
    %324 = vmatpush1.msra.mxu0 0.0
    %325 = vmatprep.subr.mxu0 0.0
    %326 = vmatpush1.msra.mxu0 0.0
    %327 = vmatprep.subr.mxu0 0.0
    %328 = vmatpush1.msra.mxu0 0.0
    %329 = vmatprep.subr.mxu0 0.0
    %330 = vmatpush1.msra.mxu0 0.0
    %331 = vmatprep.subr.mxu0 0.0
    %332 = vmatpush1.msra.mxu0 0.0
    %333 = vmatprep.subr.mxu0 0.0
    %334 = vmatpush1.msra.mxu0 0.0
    %335 = vmatprep.subr.mxu0 0.0
    %336 = vmatpush1.msra.mxu0 0.0
    %337 = vmatprep.subr.mxu0 0.0
    %338 = vmatpush1.msra.mxu0 0.0
    %339 = vmatprep.subr.mxu0 0.0
    %340 = vmatpush1.msra.mxu0 0.0
    %341 = vmatprep.subr.mxu0 0.0
    %342 = vmatpush1.msra.mxu0 0.0
    %343 = vmatprep.subr.mxu0 0.0
    %344 = vmatpush1.msra.mxu0 0.0
    %345 = vmatprep.subr.mxu0 0.0
    %346 = vmatpush1.msra.mxu0 0.0
    %347 = vmatprep.subr.mxu0 0.0
    %348 = vmatpush1.msra.mxu0 0.0
    %349 = vmatprep.subr.mxu0 0.0
    %350 = vmatpush1.msra.mxu0 0.0
    %351 = vmatprep.mubr.f32.mxu0 0.0
    %v352 = vand.u32 %v41, 4294901760
    %v353 = vsub.f32 %v41, %v352
    %v354 = vand.u32 %v353, 4294901760
    %355 = vmatmul.mubr.f32.gmra.mrb[0].mxu0 %v354
    %v356 = vpop.f32.mrb[0].mxu0
    %v357 = vadd.f32 %v281, %v356
    %v358 = vpop.f32.mrb[0].mxu0
    %v359 = vadd.f32 %v283, %v358
    %360 = vdwg.mxu0
    %v361 = vand.u32 %v46, 4294901760
    %v362 = vsub.f32 %v46, %v361
    %v363 = vand.u32 %v362, 4294901760
    %364 = vmatprep.subr.mxu0 %v363
    %v365 = vand.u32 %v44, 4294901760
    %v366 = vsub.f32 %v44, %v365
    %v367 = vand.u32 %v366, 4294901760
    %368 = vmatpush1.msra.mxu0 %v367
    %369 = vmatprep.subr.mxu0 0.0
    %370 = vmatpush1.msra.mxu0 0.0
    %371 = vmatprep.subr.mxu0 0.0
    %372 = vmatpush1.msra.mxu0 0.0
    %373 = vmatprep.subr.mxu0 0.0
    %374 = vmatpush1.msra.mxu0 0.0
    %375 = vmatprep.subr.mxu0 0.0
    %376 = vmatpush1.msra.mxu0 0.0
    %377 = vmatprep.subr.mxu0 0.0
    %378 = vmatpush1.msra.mxu0 0.0
    %379 = vmatprep.subr.mxu0 0.0
    %380 = vmatpush1.msra.mxu0 0.0
    %381 = vmatprep.subr.mxu0 0.0
    %382 = vmatpush1.msra.mxu0 0.0
    %383 = vmatprep.subr.mxu0 0.0
    %384 = vmatpush1.msra.mxu0 0.0
    %385 = vmatprep.subr.mxu0 0.0
    %386 = vmatpush1.msra.mxu0 0.0
    %387 = vmatprep.subr.mxu0 0.0
    %388 = vmatpush1.msra.mxu0 0.0
    %389 = vmatprep.subr.mxu0 0.0
    %390 = vmatpush1.msra.mxu0 0.0
    %391 = vmatprep.subr.mxu0 0.0
    %392 = vmatpush1.msra.mxu0 0.0
    %393 = vmatprep.subr.mxu0 0.0
    %394 = vmatpush1.msra.mxu0 0.0
    %395 = vmatprep.subr.mxu0 0.0
    %396 = vmatpush1.msra.mxu0 0.0
    %397 = vmatprep.subr.mxu0 0.0
    %398 = vmatpush1.msra.mxu0 0.0
    %399 = vmatprep.subr.mxu0 0.0
    %400 = vmatpush1.msra.mxu0 0.0
    %401 = vmatprep.subr.mxu0 0.0
    %402 = vmatpush1.msra.mxu0 0.0
    %403 = vmatprep.subr.mxu0 0.0
    %404 = vmatpush1.msra.mxu0 0.0
    %405 = vmatprep.subr.mxu0 0.0
    %406 = vmatpush1.msra.mxu0 0.0
    %407 = vmatprep.subr.mxu0 0.0
    %408 = vmatpush1.msra.mxu0 0.0
    %409 = vmatprep.subr.mxu0 0.0
    %410 = vmatpush1.msra.mxu0 0.0
    %411 = vmatprep.subr.mxu0 0.0
    %412 = vmatpush1.msra.mxu0 0.0
    %413 = vmatprep.subr.mxu0 0.0
    %414 = vmatpush1.msra.mxu0 0.0
    %415 = vmatprep.subr.mxu0 0.0
    %416 = vmatpush1.msra.mxu0 0.0
    %417 = vmatprep.subr.mxu0 0.0
    %418 = vmatpush1.msra.mxu0 0.0
    %419 = vmatprep.subr.mxu0 0.0
    %420 = vmatpush1.msra.mxu0 0.0
    %421 = vmatprep.subr.mxu0 0.0
    %422 = vmatpush1.msra.mxu0 0.0
    %423 = vmatprep.subr.mxu0 0.0
    %424 = vmatpush1.msra.mxu0 0.0
    %425 = vmatprep.subr.mxu0 0.0
    %426 = vmatpush1.msra.mxu0 0.0
    %427 = vmatprep.subr.mxu0 0.0
    %428 = vmatpush1.msra.mxu0 0.0
    %429 = vmatprep.subr.mxu0 0.0
    %430 = vmatpush1.msra.mxu0 0.0
    %431 = vmatprep.mubr.f32.mxu0 0.0
    %v432 = vand.u32 %v41, 4294901760
    %433 = vmatmul.mubr.f32.gmra.mrb[0].mxu0 %v432
    %v434 = vpop.f32.mrb[0].mxu0
    %v435 = vadd.f32 %v357, %v434
    %v436 = vpop.f32.mrb[0].mxu0
    %v437 = vadd.f32 %v359, %v436
    %438 = vdwg.mxu0
    %v439 = vand.u32 %v46, 4294901760
    %440 = vmatprep.subr.mxu0 %v439
    %v441 = vand.u32 %v44, 4294901760
    %442 = vmatpush1.msra.mxu0 %v441
    %443 = vmatprep.subr.mxu0 0.0
    %444 = vmatpush1.msra.mxu0 0.0
    %445 = vmatprep.subr.mxu0 0.0
    %446 = vmatpush1.msra.mxu0 0.0
    %447 = vmatprep.subr.mxu0 0.0
    %448 = vmatpush1.msra.mxu0 0.0
    %449 = vmatprep.subr.mxu0 0.0
    %450 = vmatpush1.msra.mxu0 0.0
    %451 = vmatprep.subr.mxu0 0.0
    %452 = vmatpush1.msra.mxu0 0.0
    %453 = vmatprep.subr.mxu0 0.0
    %454 = vmatpush1.msra.mxu0 0.0
    %455 = vmatprep.subr.mxu0 0.0
    %456 = vmatpush1.msra.mxu0 0.0
    %457 = vmatprep.subr.mxu0 0.0
    %458 = vmatpush1.msra.mxu0 0.0
    %459 = vmatprep.subr.mxu0 0.0
    %460 = vmatpush1.msra.mxu0 0.0
    %461 = vmatprep.subr.mxu0 0.0
    %462 = vmatpush1.msra.mxu0 0.0
    %463 = vmatprep.subr.mxu0 0.0
    %464 = vmatpush1.msra.mxu0 0.0
    %465 = vmatprep.subr.mxu0 0.0
    %466 = vmatpush1.msra.mxu0 0.0
    %467 = vmatprep.subr.mxu0 0.0
    %468 = vmatpush1.msra.mxu0 0.0
    %469 = vmatprep.subr.mxu0 0.0
    %470 = vmatpush1.msra.mxu0 0.0
    %471 = vmatprep.subr.mxu0 0.0
    %472 = vmatpush1.msra.mxu0 0.0
    %473 = vmatprep.subr.mxu0 0.0
    %474 = vmatpush1.msra.mxu0 0.0
    %475 = vmatprep.subr.mxu0 0.0
    %476 = vmatpush1.msra.mxu0 0.0
    %477 = vmatprep.subr.mxu0 0.0
    %478 = vmatpush1.msra.mxu0 0.0
    %479 = vmatprep.subr.mxu0 0.0
    %480 = vmatpush1.msra.mxu0 0.0
    %481 = vmatprep.subr.mxu0 0.0
    %482 = vmatpush1.msra.mxu0 0.0
    %483 = vmatprep.subr.mxu0 0.0
    %484 = vmatpush1.msra.mxu0 0.0
    %485 = vmatprep.subr.mxu0 0.0
    %486 = vmatpush1.msra.mxu0 0.0
    %487 = vmatprep.subr.mxu0 0.0
    %488 = vmatpush1.msra.mxu0 0.0
    %489 = vmatprep.subr.mxu0 0.0
    %490 = vmatpush1.msra.mxu0 0.0
    %491 = vmatprep.subr.mxu0 0.0
    %492 = vmatpush1.msra.mxu0 0.0
    %493 = vmatprep.subr.mxu0 0.0
    %494 = vmatpush1.msra.mxu0 0.0
    %495 = vmatprep.subr.mxu0 0.0
    %496 = vmatpush1.msra.mxu0 0.0
    %497 = vmatprep.subr.mxu0 0.0
    %498 = vmatpush1.msra.mxu0 0.0
    %499 = vmatprep.subr.mxu0 0.0
    %500 = vmatpush1.msra.mxu0 0.0
    %501 = vmatprep.subr.mxu0 0.0
    %502 = vmatpush1.msra.mxu0 0.0
    %503 = vmatprep.subr.mxu0 0.0
    %504 = vmatpush1.msra.mxu0 0.0
    %505 = vmatprep.mubr.f32.mxu0 0.0
    %v506 = vand.u32 %v41, 4294901760
    %507 = vmatmul.mubr.f32.gmra.mrb[0].mxu0 %v506
    %v508 = vpop.f32.mrb[0].mxu0
    %v509 = vadd.f32 %v435, %v508
    %v510 = vpop.f32.mrb[0].mxu0
    %v511 = vadd.f32 %v437, %v510
    %512 = vdwg.mxu0
    %v515 = vcombine.low %v509, %v511
    %517 = vst [vmem:[#allocation5] sm:$0xff] %v515
    %s518 = scalar_lea.vmem [#allocation2], 8
    %v519 = vld [vmem:[%s518] sm:$0xff]
    %v521 = vcombine.high %v519, %v519
    %v522 = vsel %vm43, %v519, 0
    %v524 = vsel %vm43, %v521, 0
    %v526 = vand.u32 %v524, 4294901760
    %527 = vmatprep.subr.mxu0 %v526
    %v528 = vand.u32 %v522, 4294901760
    %529 = vmatpush1.msra.mxu0 %v528
    %530 = vmatprep.subr.mxu0 0.0
    %531 = vmatpush1.msra.mxu0 0.0
    %532 = vmatprep.subr.mxu0 0.0
    %533 = vmatpush1.msra.mxu0 0.0
    %534 = vmatprep.subr.mxu0 0.0
    %535 = vmatpush1.msra.mxu0 0.0
    %536 = vmatprep.subr.mxu0 0.0
    %537 = vmatpush1.msra.mxu0 0.0
    %538 = vmatprep.subr.mxu0 0.0
    %539 = vmatpush1.msra.mxu0 0.0
    %540 = vmatprep.subr.mxu0 0.0
    %541 = vmatpush1.msra.mxu0 0.0
    %542 = vmatprep.subr.mxu0 0.0
    %543 = vmatpush1.msra.mxu0 0.0
    %544 = vmatprep.subr.mxu0 0.0
    %545 = vmatpush1.msra.mxu0 0.0
    %546 = vmatprep.subr.mxu0 0.0
    %547 = vmatpush1.msra.mxu0 0.0
    %548 = vmatprep.subr.mxu0 0.0
    %549 = vmatpush1.msra.mxu0 0.0
    %550 = vmatprep.subr.mxu0 0.0
    %551 = vmatpush1.msra.mxu0 0.0
    %552 = vmatprep.subr.mxu0 0.0
    %553 = vmatpush1.msra.mxu0 0.0
    %554 = vmatprep.subr.mxu0 0.0
    %555 = vmatpush1.msra.mxu0 0.0
    %556 = vmatprep.subr.mxu0 0.0
    %557 = vmatpush1.msra.mxu0 0.0
    %558 = vmatprep.subr.mxu0 0.0
    %559 = vmatpush1.msra.mxu0 0.0
    %560 = vmatprep.subr.mxu0 0.0
    %561 = vmatpush1.msra.mxu0 0.0
    %562 = vmatprep.subr.mxu0 0.0
    %563 = vmatpush1.msra.mxu0 0.0
    %564 = vmatprep.subr.mxu0 0.0
    %565 = vmatpush1.msra.mxu0 0.0
    %566 = vmatprep.subr.mxu0 0.0
    %567 = vmatpush1.msra.mxu0 0.0
    %568 = vmatprep.subr.mxu0 0.0
    %569 = vmatpush1.msra.mxu0 0.0
    %570 = vmatprep.subr.mxu0 0.0
    %571 = vmatpush1.msra.mxu0 0.0
    %572 = vmatprep.subr.mxu0 0.0
    %573 = vmatpush1.msra.mxu0 0.0
    %574 = vmatprep.subr.mxu0 0.0
    %575 = vmatpush1.msra.mxu0 0.0
    %576 = vmatprep.subr.mxu0 0.0
    %577 = vmatpush1.msra.mxu0 0.0
    %578 = vmatprep.subr.mxu0 0.0
    %579 = vmatpush1.msra.mxu0 0.0
    %580 = vmatprep.subr.mxu0 0.0
    %581 = vmatpush1.msra.mxu0 0.0
    %582 = vmatprep.subr.mxu0 0.0
    %583 = vmatpush1.msra.mxu0 0.0
    %584 = vmatprep.subr.mxu0 0.0
    %585 = vmatpush1.msra.mxu0 0.0
    %586 = vmatprep.subr.mxu0 0.0
    %587 = vmatpush1.msra.mxu0 0.0
    %588 = vmatprep.subr.mxu0 0.0
    %589 = vmatpush1.msra.mxu0 0.0
    %590 = vmatprep.subr.mxu0 0.0
    %591 = vmatpush1.msra.mxu0 0.0
    %592 = vmatprep.mubr.f32.mxu0 0.0
    %v593 = vand.u32 %v41, 4294901760
    %v594 = vsub.f32 %v41, %v593
    %v595 = vand.u32 %v594, 4294901760
    %v596 = vsub.f32 %v594, %v595
    %v597 = vand.u32 %v596, 4294901760
    %598 = vmatmul.mubr.f32.gmra.mrb[0].mxu0 %v597
    %v599 = vpop.f32.mrb[0].mxu0
    %v600 = vadd.f32 %v35, %v599
    %v601 = vpop.f32.mrb[0].mxu0
    %v602 = vadd.f32 %v35, %v601
    %603 = vdwg.mxu0
    %v604 = vand.u32 %v524, 4294901760
    %v605 = vsub.f32 %v524, %v604
    %v606 = vand.u32 %v605, 4294901760
    %v607 = vsub.f32 %v605, %v606
    %v608 = vand.u32 %v607, 4294901760
    %609 = vmatprep.subr.mxu0 %v608
    %v610 = vand.u32 %v522, 4294901760
    %v611 = vsub.f32 %v522, %v610
    %v612 = vand.u32 %v611, 4294901760
    %v613 = vsub.f32 %v611, %v612
    %v614 = vand.u32 %v613, 4294901760
    %615 = vmatpush1.msra.mxu0 %v614
    %616 = vmatprep.subr.mxu0 0.0
    %617 = vmatpush1.msra.mxu0 0.0
    %618 = vmatprep.subr.mxu0 0.0
    %619 = vmatpush1.msra.mxu0 0.0
    %620 = vmatprep.subr.mxu0 0.0
    %621 = vmatpush1.msra.mxu0 0.0
    %622 = vmatprep.subr.mxu0 0.0
    %623 = vmatpush1.msra.mxu0 0.0
    %624 = vmatprep.subr.mxu0 0.0
    %625 = vmatpush1.msra.mxu0 0.0
    %626 = vmatprep.subr.mxu0 0.0
    %627 = vmatpush1.msra.mxu0 0.0
    %628 = vmatprep.subr.mxu0 0.0
    %629 = vmatpush1.msra.mxu0 0.0
    %630 = vmatprep.subr.mxu0 0.0
    %631 = vmatpush1.msra.mxu0 0.0
    %632 = vmatprep.subr.mxu0 0.0
    %633 = vmatpush1.msra.mxu0 0.0
    %634 = vmatprep.subr.mxu0 0.0
    %635 = vmatpush1.msra.mxu0 0.0
    %636 = vmatprep.subr.mxu0 0.0
    %637 = vmatpush1.msra.mxu0 0.0
    %638 = vmatprep.subr.mxu0 0.0
    %639 = vmatpush1.msra.mxu0 0.0
    %640 = vmatprep.subr.mxu0 0.0
    %641 = vmatpush1.msra.mxu0 0.0
    %642 = vmatprep.subr.mxu0 0.0
    %643 = vmatpush1.msra.mxu0 0.0
    %644 = vmatprep.subr.mxu0 0.0
    %645 = vmatpush1.msra.mxu0 0.0
    %646 = vmatprep.subr.mxu0 0.0
    %647 = vmatpush1.msra.mxu0 0.0
    %648 = vmatprep.subr.mxu0 0.0
    %649 = vmatpush1.msra.mxu0 0.0
    %650 = vmatprep.subr.mxu0 0.0
    %651 = vmatpush1.msra.mxu0 0.0
    %652 = vmatprep.subr.mxu0 0.0
    %653 = vmatpush1.msra.mxu0 0.0
    %654 = vmatprep.subr.mxu0 0.0
    %655 = vmatpush1.msra.mxu0 0.0
    %656 = vmatprep.subr.mxu0 0.0
    %657 = vmatpush1.msra.mxu0 0.0
    %658 = vmatprep.subr.mxu0 0.0
    %659 = vmatpush1.msra.mxu0 0.0
    %660 = vmatprep.subr.mxu0 0.0
    %661 = vmatpush1.msra.mxu0 0.0
    %662 = vmatprep.subr.mxu0 0.0
    %663 = vmatpush1.msra.mxu0 0.0
    %664 = vmatprep.subr.mxu0 0.0
    %665 = vmatpush1.msra.mxu0 0.0
    %666 = vmatprep.subr.mxu0 0.0
    %667 = vmatpush1.msra.mxu0 0.0
    %668 = vmatprep.subr.mxu0 0.0
    %669 = vmatpush1.msra.mxu0 0.0
    %670 = vmatprep.subr.mxu0 0.0
    %671 = vmatpush1.msra.mxu0 0.0
    %672 = vmatprep.subr.mxu0 0.0
    %673 = vmatpush1.msra.mxu0 0.0
    %674 = vmatprep.subr.mxu0 0.0
    %675 = vmatpush1.msra.mxu0 0.0
    %676 = vmatprep.subr.mxu0 0.0
    %677 = vmatpush1.msra.mxu0 0.0
    %678 = vmatprep.mubr.f32.mxu0 0.0
    %v679 = vand.u32 %v41, 4294901760
    %680 = vmatmul.mubr.f32.gmra.mrb[0].mxu0 %v679
    %v681 = vpop.f32.mrb[0].mxu0
    %v682 = vadd.f32 %v600, %v681
    %v683 = vpop.f32.mrb[0].mxu0
    %v684 = vadd.f32 %v602, %v683
    %685 = vdwg.mxu0
    %v686 = vand.u32 %v524, 4294901760
    %v687 = vsub.f32 %v524, %v686
    %688 = vmatprep.subr.mxu0 %v687
    %v689 = vand.u32 %v522, 4294901760
    %v690 = vsub.f32 %v522, %v689
    %691 = vmatpush1.msra.mxu0 %v690
    %692 = vmatprep.subr.mxu0 0.0
    %693 = vmatpush1.msra.mxu0 0.0
    %694 = vmatprep.subr.mxu0 0.0
    %695 = vmatpush1.msra.mxu0 0.0
    %696 = vmatprep.subr.mxu0 0.0
    %697 = vmatpush1.msra.mxu0 0.0
    %698 = vmatprep.subr.mxu0 0.0
    %699 = vmatpush1.msra.mxu0 0.0
    %700 = vmatprep.subr.mxu0 0.0
    %701 = vmatpush1.msra.mxu0 0.0
    %702 = vmatprep.subr.mxu0 0.0
    %703 = vmatpush1.msra.mxu0 0.0
    %704 = vmatprep.subr.mxu0 0.0
    %705 = vmatpush1.msra.mxu0 0.0
    %706 = vmatprep.subr.mxu0 0.0
    %707 = vmatpush1.msra.mxu0 0.0
    %708 = vmatprep.subr.mxu0 0.0
    %709 = vmatpush1.msra.mxu0 0.0
    %710 = vmatprep.subr.mxu0 0.0
    %711 = vmatpush1.msra.mxu0 0.0
    %712 = vmatprep.subr.mxu0 0.0
    %713 = vmatpush1.msra.mxu0 0.0
    %714 = vmatprep.subr.mxu0 0.0
    %715 = vmatpush1.msra.mxu0 0.0
    %716 = vmatprep.subr.mxu0 0.0
    %717 = vmatpush1.msra.mxu0 0.0
    %718 = vmatprep.subr.mxu0 0.0
    %719 = vmatpush1.msra.mxu0 0.0
    %720 = vmatprep.subr.mxu0 0.0
    %721 = vmatpush1.msra.mxu0 0.0
    %722 = vmatprep.subr.mxu0 0.0
    %723 = vmatpush1.msra.mxu0 0.0
    %724 = vmatprep.subr.mxu0 0.0
    %725 = vmatpush1.msra.mxu0 0.0
    %726 = vmatprep.subr.mxu0 0.0
    %727 = vmatpush1.msra.mxu0 0.0
    %728 = vmatprep.subr.mxu0 0.0
    %729 = vmatpush1.msra.mxu0 0.0
    %730 = vmatprep.subr.mxu0 0.0
    %731 = vmatpush1.msra.mxu0 0.0
    %732 = vmatprep.subr.mxu0 0.0
    %733 = vmatpush1.msra.mxu0 0.0
    %734 = vmatprep.subr.mxu0 0.0
    %735 = vmatpush1.msra.mxu0 0.0
    %736 = vmatprep.subr.mxu0 0.0
    %737 = vmatpush1.msra.mxu0 0.0
    %738 = vmatprep.subr.mxu0 0.0
    %739 = vmatpush1.msra.mxu0 0.0
    %740 = vmatprep.subr.mxu0 0.0
    %741 = vmatpush1.msra.mxu0 0.0
    %742 = vmatprep.subr.mxu0 0.0
    %743 = vmatpush1.msra.mxu0 0.0
    %744 = vmatprep.subr.mxu0 0.0
    %745 = vmatpush1.msra.mxu0 0.0
    %746 = vmatprep.subr.mxu0 0.0
    %747 = vmatpush1.msra.mxu0 0.0
    %748 = vmatprep.subr.mxu0 0.0
    %749 = vmatpush1.msra.mxu0 0.0
    %750 = vmatprep.subr.mxu0 0.0
    %751 = vmatpush1.msra.mxu0 0.0
    %752 = vmatprep.subr.mxu0 0.0
    %753 = vmatpush1.msra.mxu0 0.0
    %754 = vmatprep.mubr.f32.mxu0 0.0
    %v755 = vand.u32 %v41, 4294901760
    %v756 = vsub.f32 %v41, %v755
    %757 = vmatmul.mubr.f32.gmra.mrb[0].mxu0 %v756
    %v758 = vpop.f32.mrb[0].mxu0
    %v759 = vadd.f32 %v682, %v758
    %v760 = vpop.f32.mrb[0].mxu0
    %v761 = vadd.f32 %v684, %v760
    %762 = vdwg.mxu0
    %v763 = vand.u32 %v524, 4294901760
    %764 = vmatprep.subr.mxu0 %v763
    %v765 = vand.u32 %v522, 4294901760
    %766 = vmatpush1.msra.mxu0 %v765
    %767 = vmatprep.subr.mxu0 0.0
    %768 = vmatpush1.msra.mxu0 0.0
    %769 = vmatprep.subr.mxu0 0.0
    %770 = vmatpush1.msra.mxu0 0.0
    %771 = vmatprep.subr.mxu0 0.0
    %772 = vmatpush1.msra.mxu0 0.0
    %773 = vmatprep.subr.mxu0 0.0
    %774 = vmatpush1.msra.mxu0 0.0
    %775 = vmatprep.subr.mxu0 0.0
    %776 = vmatpush1.msra.mxu0 0.0
    %777 = vmatprep.subr.mxu0 0.0
    %778 = vmatpush1.msra.mxu0 0.0
    %779 = vmatprep.subr.mxu0 0.0
    %780 = vmatpush1.msra.mxu0 0.0
    %781 = vmatprep.subr.mxu0 0.0
    %782 = vmatpush1.msra.mxu0 0.0
    %783 = vmatprep.subr.mxu0 0.0
    %784 = vmatpush1.msra.mxu0 0.0
    %785 = vmatprep.subr.mxu0 0.0
    %786 = vmatpush1.msra.mxu0 0.0
    %787 = vmatprep.subr.mxu0 0.0
    %788 = vmatpush1.msra.mxu0 0.0
    %789 = vmatprep.subr.mxu0 0.0
    %790 = vmatpush1.msra.mxu0 0.0
    %791 = vmatprep.subr.mxu0 0.0
    %792 = vmatpush1.msra.mxu0 0.0
    %793 = vmatprep.subr.mxu0 0.0
    %794 = vmatpush1.msra.mxu0 0.0
    %795 = vmatprep.subr.mxu0 0.0
    %796 = vmatpush1.msra.mxu0 0.0
    %797 = vmatprep.subr.mxu0 0.0
    %798 = vmatpush1.msra.mxu0 0.0
    %799 = vmatprep.subr.mxu0 0.0
    %800 = vmatpush1.msra.mxu0 0.0
    %801 = vmatprep.subr.mxu0 0.0
    %802 = vmatpush1.msra.mxu0 0.0
    %803 = vmatprep.subr.mxu0 0.0
    %804 = vmatpush1.msra.mxu0 0.0
    %805 = vmatprep.subr.mxu0 0.0
    %806 = vmatpush1.msra.mxu0 0.0
    %807 = vmatprep.subr.mxu0 0.0
    %808 = vmatpush1.msra.mxu0 0.0
    %809 = vmatprep.subr.mxu0 0.0
    %810 = vmatpush1.msra.mxu0 0.0
    %811 = vmatprep.subr.mxu0 0.0
    %812 = vmatpush1.msra.mxu0 0.0
    %813 = vmatprep.subr.mxu0 0.0
    %814 = vmatpush1.msra.mxu0 0.0
    %815 = vmatprep.subr.mxu0 0.0
    %816 = vmatpush1.msra.mxu0 0.0
    %817 = vmatprep.subr.mxu0 0.0
    %818 = vmatpush1.msra.mxu0 0.0
    %819 = vmatprep.subr.mxu0 0.0
    %820 = vmatpush1.msra.mxu0 0.0
    %821 = vmatprep.subr.mxu0 0.0
    %822 = vmatpush1.msra.mxu0 0.0
    %823 = vmatprep.subr.mxu0 0.0
    %824 = vmatpush1.msra.mxu0 0.0
    %825 = vmatprep.subr.mxu0 0.0
    %826 = vmatpush1.msra.mxu0 0.0
    %827 = vmatprep.subr.mxu0 0.0
    %828 = vmatpush1.msra.mxu0 0.0
    %829 = vmatprep.mubr.f32.mxu0 0.0
    %v830 = vand.u32 %v41, 4294901760
    %v831 = vsub.f32 %v41, %v830
    %v832 = vand.u32 %v831, 4294901760
    %833 = vmatmul.mubr.f32.gmra.mrb[0].mxu0 %v832
    %v834 = vpop.f32.mrb[0].mxu0
    %v835 = vadd.f32 %v759, %v834
    %v836 = vpop.f32.mrb[0].mxu0
    %v837 = vadd.f32 %v761, %v836
    %838 = vdwg.mxu0
    %v839 = vand.u32 %v524, 4294901760
    %v840 = vsub.f32 %v524, %v839
    %v841 = vand.u32 %v840, 4294901760
    %842 = vmatprep.subr.mxu0 %v841
    %v843 = vand.u32 %v522, 4294901760
    %v844 = vsub.f32 %v522, %v843
    %v845 = vand.u32 %v844, 4294901760
    %846 = vmatpush1.msra.mxu0 %v845
    %847 = vmatprep.subr.mxu0 0.0
    %848 = vmatpush1.msra.mxu0 0.0
    %849 = vmatprep.subr.mxu0 0.0
    %850 = vmatpush1.msra.mxu0 0.0
    %851 = vmatprep.subr.mxu0 0.0
    %852 = vmatpush1.msra.mxu0 0.0
    %853 = vmatprep.subr.mxu0 0.0
    %854 = vmatpush1.msra.mxu0 0.0
    %855 = vmatprep.subr.mxu0 0.0
    %856 = vmatpush1.msra.mxu0 0.0
    %857 = vmatprep.subr.mxu0 0.0
    %858 = vmatpush1.msra.mxu0 0.0
    %859 = vmatprep.subr.mxu0 0.0
    %860 = vmatpush1.msra.mxu0 0.0
    %861 = vmatprep.subr.mxu0 0.0
    %862 = vmatpush1.msra.mxu0 0.0
    %863 = vmatprep.subr.mxu0 0.0
    %864 = vmatpush1.msra.mxu0 0.0
    %865 = vmatprep.subr.mxu0 0.0
    %866 = vmatpush1.msra.mxu0 0.0
    %867 = vmatprep.subr.mxu0 0.0
    %868 = vmatpush1.msra.mxu0 0.0
    %869 = vmatprep.subr.mxu0 0.0
    %870 = vmatpush1.msra.mxu0 0.0
    %871 = vmatprep.subr.mxu0 0.0
    %872 = vmatpush1.msra.mxu0 0.0
    %873 = vmatprep.subr.mxu0 0.0
    %874 = vmatpush1.msra.mxu0 0.0
    %875 = vmatprep.subr.mxu0 0.0
    %876 = vmatpush1.msra.mxu0 0.0
    %877 = vmatprep.subr.mxu0 0.0
    %878 = vmatpush1.msra.mxu0 0.0
    %879 = vmatprep.subr.mxu0 0.0
    %880 = vmatpush1.msra.mxu0 0.0
    %881 = vmatprep.subr.mxu0 0.0
    %882 = vmatpush1.msra.mxu0 0.0
    %883 = vmatprep.subr.mxu0 0.0
    %884 = vmatpush1.msra.mxu0 0.0
    %885 = vmatprep.subr.mxu0 0.0
    %886 = vmatpush1.msra.mxu0 0.0
    %887 = vmatprep.subr.mxu0 0.0
    %888 = vmatpush1.msra.mxu0 0.0
    %889 = vmatprep.subr.mxu0 0.0
    %890 = vmatpush1.msra.mxu0 0.0
    %891 = vmatprep.subr.mxu0 0.0
    %892 = vmatpush1.msra.mxu0 0.0
    %893 = vmatprep.subr.mxu0 0.0
    %894 = vmatpush1.msra.mxu0 0.0
    %895 = vmatprep.subr.mxu0 0.0
    %896 = vmatpush1.msra.mxu0 0.0
    %897 = vmatprep.subr.mxu0 0.0
    %898 = vmatpush1.msra.mxu0 0.0
    %899 = vmatprep.subr.mxu0 0.0
    %900 = vmatpush1.msra.mxu0 0.0
    %901 = vmatprep.subr.mxu0 0.0
    %902 = vmatpush1.msra.mxu0 0.0
    %903 = vmatprep.subr.mxu0 0.0
    %904 = vmatpush1.msra.mxu0 0.0
    %905 = vmatprep.subr.mxu0 0.0
    %906 = vmatpush1.msra.mxu0 0.0
    %907 = vmatprep.subr.mxu0 0.0
    %908 = vmatpush1.msra.mxu0 0.0
    %909 = vmatprep.mubr.f32.mxu0 0.0
    %v910 = vand.u32 %v41, 4294901760
    %911 = vmatmul.mubr.f32.gmra.mrb[0].mxu0 %v910
    %v912 = vpop.f32.mrb[0].mxu0
    %v913 = vadd.f32 %v835, %v912
    %v914 = vpop.f32.mrb[0].mxu0
    %v915 = vadd.f32 %v837, %v914
    %916 = vdwg.mxu0
    %v917 = vand.u32 %v524, 4294901760
    %918 = vmatprep.subr.mxu0 %v917
    %v919 = vand.u32 %v522, 4294901760
    %920 = vmatpush1.msra.mxu0 %v919
    %921 = vmatprep.subr.mxu0 0.0
    %922 = vmatpush1.msra.mxu0 0.0
    %923 = vmatprep.subr.mxu0 0.0
    %924 = vmatpush1.msra.mxu0 0.0
    %925 = vmatprep.subr.mxu0 0.0
    %926 = vmatpush1.msra.mxu0 0.0
    %927 = vmatprep.subr.mxu0 0.0
    %928 = vmatpush1.msra.mxu0 0.0
    %929 = vmatprep.subr.mxu0 0.0
    %930 = vmatpush1.msra.mxu0 0.0
    %931 = vmatprep.subr.mxu0 0.0
    %932 = vmatpush1.msra.mxu0 0.0
    %933 = vmatprep.subr.mxu0 0.0
    %934 = vmatpush1.msra.mxu0 0.0
    %935 = vmatprep.subr.mxu0 0.0
    %936 = vmatpush1.msra.mxu0 0.0
    %937 = vmatprep.subr.mxu0 0.0
    %938 = vmatpush1.msra.mxu0 0.0
    %939 = vmatprep.subr.mxu0 0.0
    %940 = vmatpush1.msra.mxu0 0.0
    %941 = vmatprep.subr.mxu0 0.0
    %942 = vmatpush1.msra.mxu0 0.0
    %943 = vmatprep.subr.mxu0 0.0
    %944 = vmatpush1.msra.mxu0 0.0
    %945 = vmatprep.subr.mxu0 0.0
    %946 = vmatpush1.msra.mxu0 0.0
    %947 = vmatprep.subr.mxu0 0.0
    %948 = vmatpush1.msra.mxu0 0.0
    %949 = vmatprep.subr.mxu0 0.0
    %950 = vmatpush1.msra.mxu0 0.0
    %951 = vmatprep.subr.mxu0 0.0
    %952 = vmatpush1.msra.mxu0 0.0
    %953 = vmatprep.subr.mxu0 0.0
    %954 = vmatpush1.msra.mxu0 0.0
    %955 = vmatprep.subr.mxu0 0.0
    %956 = vmatpush1.msra.mxu0 0.0
    %957 = vmatprep.subr.mxu0 0.0
    %958 = vmatpush1.msra.mxu0 0.0
    %959 = vmatprep.subr.mxu0 0.0
    %960 = vmatpush1.msra.mxu0 0.0
    %961 = vmatprep.subr.mxu0 0.0
    %962 = vmatpush1.msra.mxu0 0.0
    %963 = vmatprep.subr.mxu0 0.0
    %964 = vmatpush1.msra.mxu0 0.0
    %965 = vmatprep.subr.mxu0 0.0
    %966 = vmatpush1.msra.mxu0 0.0
    %967 = vmatprep.subr.mxu0 0.0
    %968 = vmatpush1.msra.mxu0 0.0
    %969 = vmatprep.subr.mxu0 0.0
    %970 = vmatpush1.msra.mxu0 0.0
    %971 = vmatprep.subr.mxu0 0.0
    %972 = vmatpush1.msra.mxu0 0.0
    %973 = vmatprep.subr.mxu0 0.0
    %974 = vmatpush1.msra.mxu0 0.0
    %975 = vmatprep.subr.mxu0 0.0
    %976 = vmatpush1.msra.mxu0 0.0
    %977 = vmatprep.subr.mxu0 0.0
    %978 = vmatpush1.msra.mxu0 0.0
    %979 = vmatprep.subr.mxu0 0.0
    %980 = vmatpush1.msra.mxu0 0.0
    %981 = vmatprep.subr.mxu0 0.0
    %982 = vmatpush1.msra.mxu0 0.0
    %983 = vmatprep.mubr.f32.mxu0 0.0
    %v984 = vand.u32 %v41, 4294901760
    %985 = vmatmul.mubr.f32.gmra.mrb[0].mxu0 %v984
    %v986 = vpop.f32.mrb[0].mxu0
    %v987 = vadd.f32 %v913, %v986
    %v988 = vpop.f32.mrb[0].mxu0
    %v989 = vadd.f32 %v915, %v988
    %990 = vdwg.mxu0
    %v993 = vcombine.low %v987, %v989
    %s995 = scalar_lea.vmem [#allocation5], 8
    %996 = vst [vmem:[%s995] sm:$0xff] %v993
    // Predicated region
    $region18: #{tpu_custom_call.1} parent=1 // pred_check
      _
    $region19: #{tpu_custom_call.1} parent=1 // pred_check_branch
      %998 = sbr.rel (0) target = $region21
    $region20: #{tpu_custom_call.1} parent=1 // pred_region
      %s1000 = ssub.s32 256, 256
      %1001 = vsyncadd [#allocation4], %s1000
      %s1002 = sshll.u32 [#allocation5], 4
      %s1003 = int_to_ptr.vmem [resolvable:$true] %s1002
      %1008 = dma.vmem_to_hbm [thread:$0]  %s1003, 256, %s3, [#allocation4], 128, 128, 8
    $region21: #{tpu_custom_call.1} parent=1 // pred_fallthru
      _
    // Predicated region
    $region22: #{tpu_custom_call.1} parent=1 // pred_check
      _
    $region23: #{tpu_custom_call.1} parent=1 // pred_check_branch
      %1010 = sbr.rel (0) target = $region25
    $region24: #{tpu_custom_call.1} parent=1 // pred_region
      %1011 = dma.done [#allocation4], 256
    $region25: #{tpu_custom_call.1} parent=1 // pred_fallthru
      _
    %1012 = vsyncpa [#allocation3], 1
    %1013 = vsyncpa [#allocation4], 1

</llo_original>
